<compile_context>
chip_gen: v5e
topology: v5e:2x2
jax: 0.10.0
libtpu: 0.0.40
codegen_flags: <defaults>
</compile_context>

<pallas_src>
from functools import partial

import jax
import jax.numpy as jnp
from jax.experimental import pallas as pl
from jax.experimental.pallas import tpu as pltpu


def _focus_conv_kernel(x_ref, w_ref, b_ref, o_ref):
    # x_ref: (1, Cin, TS)   activation tile, channels-first, spatial on lanes
    # w_ref: (Cout, Cin)    1x1 conv weight with BN scale pre-folded
    # b_ref: (Cout, 1)      folded BN bias (f32)
    # o_ref: (1, Cout, TS)  output tile (NCHW-flattened layout)
    y = jnp.dot(w_ref[...], x_ref[0], preferred_element_type=jnp.float32)  # (Cout, TS) f32
    y = y + b_ref[...]
    # SiLU: y * sigmoid(y); exp and approx-reciprocal both issue on the EUP slot.
    sig = pl.reciprocal(1.0 + jnp.exp(-y), approx=True)
    o_ref[0] = (y * sig).astype(o_ref.dtype)


@partial(jax.jit, static_argnames=("eps", "compute_dtype", "ts_max"))
def focus_forward(x, conv_w, bn_gamma, bn_beta, bn_mean, bn_var, eps=1e-3,
                  compute_dtype=jnp.bfloat16, ts_max=8192):
    """x: (N, C1, H, W) float32 NCHW.  conv_w: (C2, 4*C1, 1, 1).  Returns NCHW f32."""
    n, c1, h, w = x.shape
    assert h % 2 == 0 and w % 2 == 0
    cout = conv_w.shape[0]
    cin = 4 * c1
    h2, w2 = h // 2, w // 2
    s = h2 * w2

    # Space-to-depth exactly as torch.cat([...], dim=1): one fused XLA pass
    # (strided-slice gather + concat + bf16 cast); stays channels-first so the
    # kernel consumes it with zero further layout work.
    xs = jnp.concatenate(
        [x[..., ::2, ::2], x[..., 1::2, ::2], x[..., ::2, 1::2], x[..., 1::2, 1::2]],
        axis=1,
    )  # (N, 4*C1, H/2, W/2)
    xm = xs.reshape(n, cin, s).astype(compute_dtype)  # free row-major reshape

    # Fold BN (eval form) into the conv weight / bias.
    inv_std = 1.0 / jnp.sqrt(bn_var + eps)
    scale = bn_gamma * inv_std                                            # (Cout,)
    wm = (conv_w.reshape(cout, cin) * scale[:, None]).astype(compute_dtype)  # (Cout, Cin)
    bias = (bn_beta - bn_mean * scale).reshape(cout, 1).astype(jnp.float32)  # (Cout, 1)

    # Spatial tile: lane-dense and large (amortizes ~0.35us/step grid overhead),
    # sized well inside scoped VMEM on v5e/v6e/v7x even double-buffered.
    if s % 128 == 0:
        ts = min(s, ts_max)           # ts_max is a multiple of 128
    else:
        ts = s                        # small/ragged spatial extent: one full-width block
    grid = (n, pl.cdiv(s, ts))        # >= N blocks -> both v7x TensorCores busy

    out = pl.pallas_call(
        _focus_conv_kernel,
        out_shape=jax.ShapeDtypeStruct((n, cout, s), jnp.float32),
        grid=grid,
        in_specs=[
            pl.BlockSpec((1, cin, ts), lambda nb, sb: (nb, 0, sb)),
            pl.BlockSpec((cout, cin), lambda nb, sb: (0, 0)),
            pl.BlockSpec((cout, 1), lambda nb, sb: (0, 0)),
        ],
        out_specs=pl.BlockSpec((1, cout, ts), lambda nb, sb: (nb, 0, sb)),
        compiler_params=pltpu.CompilerParams(
            dimension_semantics=("parallel", "parallel"),
            vmem_limit_bytes=32 * 1024 * 1024,
        ),
    )(xm, wm, bias)

    # Already NC(HW): only a free reshape back to NCHW, no transpose.
    return out.reshape(n, cout, h2, w2)


def _reference(x, conv_w, bn_gamma, bn_beta, bn_mean, bn_var, eps=1e-3):
    xs = jnp.concatenate(
        [x[..., ::2, ::2], x[..., 1::2, ::2], x[..., ::2, 1::2], x[..., 1::2, 1::2]],
        axis=1,
    )
    cout, cin = conv_w.shape[0], conv_w.shape[1]
    y = jnp.einsum("nchw,oc->nohw", xs, conv_w.reshape(cout, cin))
    inv_std = 1.0 / jnp.sqrt(bn_var + eps)
    y = y * (bn_gamma * inv_std)[None, :, None, None] + (
        bn_beta - bn_mean * bn_gamma * inv_std
    )[None, :, None, None]
    return y * jax.nn.sigmoid(y)


if __name__ == "__main__":
    # Small shapes consistent with the module: N=2, C1=4, H=W=16, C2=32.
    N, C1, H, W = 2, 4, 16, 16
    C2 = 32

    key = jax.random.PRNGKey(0)
    kx, kw, kg, kb, km, kv = jax.random.split(key, 6)

    x = jax.random.normal(kx, (N, C1, H, W), dtype=jnp.float32)
    conv_w = jax.random.normal(kw, (C2, 4 * C1, 1, 1), dtype=jnp.float32) * 0.1
    bn_gamma = 1.0 + 0.1 * jax.random.normal(kg, (C2,), dtype=jnp.float32)
    bn_beta = 0.1 * jax.random.normal(kb, (C2,), dtype=jnp.float32)
    bn_mean = 0.1 * jax.random.normal(km, (C2,), dtype=jnp.float32)
    bn_var = jnp.abs(jax.random.normal(kv, (C2,), dtype=jnp.float32)) + 0.5

    out = focus_forward(x, conv_w, bn_gamma, bn_beta, bn_mean, bn_var)
    out = jax.block_until_ready(out)

    ref = _reference(x, conv_w, bn_gamma, bn_beta, bn_mean, bn_var)
    assert out.shape == (N, C2, H // 2, W // 2), out.shape
    # bf16 MXU inputs + approx-reciprocal sigmoid vs. a pure-f32 reference.
    assert jnp.allclose(out, ref, atol=2e-2, rtol=2e-2), "mismatch vs reference"

    print("KERNEL_OK")
</pallas_src>

<mosaic_0001>
module attributes {stable_mosaic.version = 11 : i64} {
  func.func @_focus_conv_kernel(%arg0: i32, %arg1: i32, %arg2: memref<1x16x64xbf16, #tpu.memory_space<vmem>>, %arg3: memref<32x16xbf16, #tpu.memory_space<vmem>>, %arg4: memref<32x1xf32, #tpu.memory_space<vmem>>, %arg5: memref<1x32x64xf32, #tpu.memory_space<vmem>>) attributes {dimension_semantics = [#tpu.dimension_semantics<parallel>, #tpu.dimension_semantics<parallel>], iteration_bounds = array<i64: 2, 1>, scalar_prefetch = 0 : i64, scratch_operands = 0 : i64, tpu.core_type = #tpu.core_type<tc>, window_params = [{transform_indices = @transform_0, window_bounds = array<i64: 1, 16, 64>}, {pipeline_mode = #tpu.pipeline_mode<synchronous>, transform_indices = @transform_1, window_bounds = array<i64: 32, 16>}, {pipeline_mode = #tpu.pipeline_mode<synchronous>, transform_indices = @transform_2, window_bounds = array<i64: 32, 1>}, {transform_indices = @transform_3, window_bounds = array<i64: 1, 32, 64>}]} {
    %c0 = arith.constant 0 : index
    %c0_0 = arith.constant 0 : index
    %0 = vector.load %arg3[%c0, %c0_0] : memref<32x16xbf16, #tpu.memory_space<vmem>>, vector<32x16xbf16>
    %c0_1 = arith.constant 0 : index
    %c0_2 = arith.constant 0 : index
    %c0_3 = arith.constant 0 : index
    %1 = vector.load %arg2[%c0_1, %c0_2, %c0_3] : memref<1x16x64xbf16, #tpu.memory_space<vmem>>, vector<1x16x64xbf16>
    %2 = vector.shape_cast %1 : vector<1x16x64xbf16> to vector<16x64xbf16>
    %cst = arith.constant dense<0.000000e+00> : vector<32x64xf32>
    %3 = tpu.matmul %0, %2, %cst {dimension_numbers = #tpu.dot_dimension_numbers<[1], [0], [0], [1], [0, 0, 1, 1], [], []>} : vector<32x16xbf16>, vector<16x64xbf16>, vector<32x64xf32> -> vector<32x64xf32>
    %c0_4 = arith.constant 0 : index
    %c0_5 = arith.constant 0 : index
    %4 = vector.load %arg4[%c0_4, %c0_5] : memref<32x1xf32, #tpu.memory_space<vmem>>, vector<32x1xf32>
    %5 = vector.broadcast %4 : vector<32x1xf32> to vector<32x64xf32>
    %6 = arith.addf %3, %5 : vector<32x64xf32>
    %cst_6 = arith.constant 0.000000e+00 : f32
    %7 = vector.broadcast %cst_6 : f32 to vector<32x64xf32>
    %8 = arith.subf %7, %6 : vector<32x64xf32>
    %9 = math.exp %8 : vector<32x64xf32>
    %cst_7 = arith.constant 1.000000e+00 : f32
    %10 = vector.broadcast %cst_7 : f32 to vector<32x64xf32>
    %11 = arith.addf %10, %9 : vector<32x64xf32>
    %12 = tpu.reciprocal %11 {approx = true} : vector<32x64xf32> -> vector<32x64xf32>
    %13 = arith.mulf %6, %12 : vector<32x64xf32>
    %c0_8 = arith.constant 0 : index
    %c0_9 = arith.constant 0 : index
    %c0_10 = arith.constant 0 : index
    %14 = vector.load %arg5[%c0_8, %c0_9, %c0_10] : memref<1x32x64xf32, #tpu.memory_space<vmem>>, vector<1x32x64xf32>
    %15 = vector.shape_cast %14 : vector<1x32x64xf32> to vector<32x64xf32>
    %16 = vector.shape_cast %13 : vector<32x64xf32> to vector<1x32x64xf32>
    tpu.vector_store %arg5[%c0_8, %c0_9, %c0_10], %16 {strides = array<i32>} : memref<1x32x64xf32, #tpu.memory_space<vmem>>, vector<1x32x64xf32>,
    return
  }
  func.func @transform_0(%arg0: i32, %arg1: i32) -> (i32, i32, i32) {
    %c0_i32 = arith.constant 0 : i32
    %c0_i32_0 = arith.constant 0 : i32
    return %arg0, %c0_i32, %arg1 : i32, i32, i32
  }
  func.func @transform_1(%arg0: i32, %arg1: i32) -> (i32, i32) {
    %c0_i32 = arith.constant 0 : i32
    %c0_i32_0 = arith.constant 0 : i32
    %c0_i32_1 = arith.constant 0 : i32
    return %c0_i32, %c0_i32_0 : i32, i32
  }
  func.func @transform_2(%arg0: i32, %arg1: i32) -> (i32, i32) {
    %c0_i32 = arith.constant 0 : i32
    %c0_i32_0 = arith.constant 0 : i32
    %c0_i32_1 = arith.constant 0 : i32
    return %c0_i32, %c0_i32_0 : i32, i32
  }
  func.func @transform_3(%arg0: i32, %arg1: i32) -> (i32, i32, i32) {
    %c0_i32 = arith.constant 0 : i32
    %c0_i32_0 = arith.constant 0 : i32
    return %arg0, %c0_i32, %arg1 : i32, i32, i32
  }
}

</mosaic_0001>

<llo_original>
// kernel: focus_forward.1
$region0: #{focus_forward.1}
  #allocation0 [shape = 'u32[]', space=smem, size = 0x4, offset = 0x4, fixed_abs, tag = 'smem constant byte address 0x4 - core index']
  #allocation1 [shape = 'u32[72,128]{1,0:T(1,128)}', space=vmem, size = 0x9000, scoped, tag = 'internal scratch']
  %s0 = inlined_call_operand.vmem [shape: bf16[2,16,64], index: 0, kind: input, shape index: {}]
  %s1 = inlined_call_operand.vmem [shape: bf16[32,16], index: 1, kind: input, shape index: {}]
  %s2 = inlined_call_operand.vmem [shape: f32[32,1], index: 2, kind: input, shape index: {}]
  %s3 = inlined_call_operand.vmem [shape: f32[2,32,64], index: 3, kind: output, shape index: {}]
  %s4 = sld [smem:[#allocation0]]
  $region45: #{focus_forward.1} parent=0
    _
  %s6 = ssub.s32 1, %s4
  %s7 = scalar_select 0, %s6, %s4
  loop: start=0, step=1, limit=4
  $region2: #{focus_forward.1} parent=0 // loop_pre_header
    _
  $region3: #{focus_forward.1} parent=0 // loop_header
    %s9 = sphi 0, %s13
    %p10 = scmp.ge.s32.totalorder %s9, 4
    %s16 = sphi 0, %s28
    %s17 = sphi 0, %s24
    %s18 = sphi 0, %s16
    %s19 = sphi 0, %s17
    %s20 = sphi 0, %s18
    %s21 = sphi 0, %s19
    %s33 = sphi 0, %s35
    %s36 = sphi 0, %s33
    %s37 = sphi 0, %s36
    %s53 = sphi 0, %s37
    %s57 = sphi 0, %s57
    %s59 = sphi 0, %s57
    %s60 = sphi 0, %s59
    %s74 = sphi 0, %s60
    %s78 = sphi 0, %s78
    %s80 = sphi 0, %s78
    %s81 = sphi 0, %s80
    %s95 = sphi 0, %s81
    %s103 = sphi 0, %s105
    %s106 = sphi 0, %s103
    %s107 = sphi 0, %s106
    %s123 = sphi 0, %s107
  $region4: #{focus_forward.1} parent=0 // loop_header_branch
    %12 = sbr.rel (%p10) target = $region8
  $region5: #{focus_forward.1} parent=0 // loop_body
    %s14 = ssub.s32 %s9, 1
    %s15 = ssub.s32 %s9, 2
    %s22 = sadd.s32 1, %s17
    %p23 = scmp.ge.s32.totalorder %s22, 1
    %s24 = scalar_select %p23, 0, %s22
    %s25 = sadd.s32 1, %s16
    %s26 = scalar_select %p23, %s25, %s16
    %p27 = scmp.ge.s32.totalorder %s26, 2
    %s28 = scalar_select %p27, 0, %s26
    %s29 = ssub.s32 %s16, %s28
    %s30 = ssub.s32 %s17, %s24
    %s31 = sor.u32 %s29, %s30
    %p32 = scmp.eq.s32.totalorder %s31, 0
    %s34 = sadd.s32 %s33, 1
    %s35 = scalar_select %p32, %s33, %s34
    %p38 = pneg %p32
    %p39 = scmp.eq.s32.totalorder %s9, 1
    %p40 = por %p38, %p39
    %p41 = scmp.ne.s32.totalorder %s33, %s36
    %p42 = scmp.eq.s32.totalorder %s9, 0
    %p43 = por %p41, %p42
    %p44 = scmp.ne.s32.totalorder %s33, %s36
    %p45 = scmp.eq.s32.totalorder %s14, 1
    %p46 = por %p44, %p45
    %p47 = scmp.ne.s32.totalorder %s36, %s37
    %p48 = scmp.eq.s32.totalorder %s14, 0
    %p49 = por %p47, %p48
    %p50 = scmp.ne.s32.totalorder %s36, %s37
    %p51 = scmp.eq.s32.totalorder %s15, 1
    %p52 = por %p50, %p51
    %p54 = scmp.ne.s32.totalorder %s37, %s53
    %p55 = scmp.eq.s32.totalorder %s15, 0
    %p56 = por %p54, %p55
    %s58 = sadd.s32 %s57, 1
    %p61 = scmp.eq.s32.totalorder %s9, 1
    %p62 = scmp.ne.s32.totalorder %s57, %s59
    %p63 = scmp.eq.s32.totalorder %s9, 0
    %p64 = por %p62, %p63
    %p65 = scmp.ne.s32.totalorder %s57, %s59
    %p66 = scmp.eq.s32.totalorder %s14, 1
    %p67 = por %p65, %p66
    %p68 = scmp.ne.s32.totalorder %s59, %s60
    %p69 = scmp.eq.s32.totalorder %s14, 0
    %p70 = por %p68, %p69
    %p71 = scmp.ne.s32.totalorder %s59, %s60
    %p72 = scmp.eq.s32.totalorder %s15, 1
    %p73 = por %p71, %p72
    %p75 = scmp.ne.s32.totalorder %s60, %s74
    %p76 = scmp.eq.s32.totalorder %s15, 0
    %p77 = por %p75, %p76
    %s79 = sadd.s32 %s78, 1
    %p82 = scmp.eq.s32.totalorder %s9, 1
    %p83 = scmp.ne.s32.totalorder %s78, %s80
    %p84 = scmp.eq.s32.totalorder %s9, 0
    %p85 = por %p83, %p84
    %p86 = scmp.ne.s32.totalorder %s78, %s80
    %p87 = scmp.eq.s32.totalorder %s14, 1
    %p88 = por %p86, %p87
    %p89 = scmp.ne.s32.totalorder %s80, %s81
    %p90 = scmp.eq.s32.totalorder %s14, 0
    %p91 = por %p89, %p90
    %p92 = scmp.ne.s32.totalorder %s80, %s81
    %p93 = scmp.eq.s32.totalorder %s15, 1
    %p94 = por %p92, %p93
    %p96 = scmp.ne.s32.totalorder %s81, %s95
    %p97 = scmp.eq.s32.totalorder %s15, 0
    %p98 = por %p96, %p97
    %s99 = ssub.s32 %s16, %s28
    %s100 = ssub.s32 %s17, %s24
    %s101 = sor.u32 %s99, %s100
    %p102 = scmp.eq.s32.totalorder %s101, 0
    %s104 = sadd.s32 %s103, 1
    %s105 = scalar_select %p102, %s103, %s104
    %p108 = pneg %p102
    %p109 = scmp.eq.s32.totalorder %s9, 1
    %p110 = por %p108, %p109
    %p111 = scmp.ne.s32.totalorder %s103, %s106
    %p112 = scmp.eq.s32.totalorder %s9, 0
    %p113 = por %p111, %p112
    %p114 = scmp.ne.s32.totalorder %s103, %s106
    %p115 = scmp.eq.s32.totalorder %s14, 1
    %p116 = por %p114, %p115
    %p117 = scmp.ne.s32.totalorder %s106, %s107
    %p118 = scmp.eq.s32.totalorder %s14, 0
    %p119 = por %p117, %p118
    %p120 = scmp.ne.s32.totalorder %s106, %s107
    %p121 = scmp.eq.s32.totalorder %s15, 1
    %p122 = por %p120, %p121
    %p124 = scmp.ne.s32.totalorder %s107, %s123
    %p125 = scmp.eq.s32.totalorder %s15, 0
    %p126 = por %p124, %p125
    %p127 = scmp.le.s32.totalorder 1, %s9
    %p128 = scmp.lt.s32.totalorder %s9, 3
    %p129 = pnand %p127, %p128
    %p130 = pneg %p129
    // Predicated region
    $region9: #{focus_forward.1} parent=5 // pred_check
      _
    $region10: #{focus_forward.1} parent=5 // pred_check_branch
      %132 = sbr.rel (%p129) target = $region12
    $region11: #{focus_forward.1} parent=5 // pred_region
      %s133 = ssub.s32 %s9, 1
      // Predicated region
      $region13: #{focus_forward.1} parent=11 // pred_check
        %p134 = pneg %p70
      $region14: #{focus_forward.1} parent=11 // pred_check_branch
        %136 = sbr.rel (%p134) target = $region16
      $region15: #{focus_forward.1} parent=11 // pred_region
        _
      $region16: #{focus_forward.1} parent=11 // pred_fallthru
        _
      // Predicated region
      $region17: #{focus_forward.1} parent=11 // pred_check
        %p137 = pneg %p91
      $region18: #{focus_forward.1} parent=11 // pred_check_branch
        %139 = sbr.rel (%p137) target = $region20
      $region19: #{focus_forward.1} parent=11 // pred_region
        _
      $region20: #{focus_forward.1} parent=11 // pred_fallthru
        _
    $region12: #{focus_forward.1} parent=5 // pred_fallthru
      _
    %p140 = scmp.lt.s32.totalorder %s9, 2
    // Predicated region
    $region21: #{focus_forward.1} parent=5 // pred_check
      %p141 = pneg %p140
    $region22: #{focus_forward.1} parent=5 // pred_check_branch
      %143 = sbr.rel (%p141) target = $region24
    $region23: #{focus_forward.1} parent=5 // pred_region
      // Predicated region
      $region25: #{focus_forward.1} parent=23 // pred_check
        %p144 = pneg %p43
      $region26: #{focus_forward.1} parent=23 // pred_check_branch
        %146 = sbr.rel (%p144) target = $region28
      $region27: #{focus_forward.1} parent=23 // pred_region
        %p147 = scmp.lt.s32.totalorder %s16, 1
        %s148 = scalar_select %p147, %s16, 1
        %p149 = scmp.lt.s32.totalorder %s17, 0
        %s150 = scalar_select %p149, %s17, 0
        %s151 = smul.addr %s148, 2
        %s152 = sadd.s32 %s150, %s151
        %s153 = smul.addr %s152, 4
        %s154 = scalar_lea.vmem %s0, %s153
      $region28: #{focus_forward.1} parent=23 // pred_fallthru
        _
    $region24: #{focus_forward.1} parent=5 // pred_fallthru
      _
    %p155 = scmp.le.s32.totalorder 1, %s9
    %p156 = scmp.lt.s32.totalorder %s9, 3
    %p157 = pnand %p155, %p156
    %p158 = pneg %p157
    // Predicated region
    $region29: #{focus_forward.1} parent=5 // pred_check
      _
    $region30: #{focus_forward.1} parent=5 // pred_check_branch
      %160 = sbr.rel (%p157) target = $region32
    $region31: #{focus_forward.1} parent=5 // pred_region
      %s161 = ssub.s32 %s9, 1
      %p162 = scmp.lt.s32.totalorder %s18, 1
      %s163 = scalar_select %p162, %s18, 1
      %p164 = scmp.lt.s32.totalorder %s19, 0
      %s165 = scalar_select %p164, %s19, 0
      %s166 = smul.addr %s163, 2
      %s167 = sadd.s32 %s165, %s166
      %s168 = smul.addr %s167, 4
      %s169 = scalar_lea.vmem %s0, %s168
      %p170 = pneg %p49
      %p171 = pneg %p46
      %p172 = pneg %p70
      %p173 = pneg %p67
      %p174 = pneg %p91
      %p175 = pneg %p88
      %p176 = pneg %p119
      %p177 = pneg %p116
      %p178 = scmp.lt.s32.totalorder %s18, 1
      %s179 = scalar_select %p178, %s18, 1
      %p180 = scmp.lt.s32.totalorder %s19, 0
      %s181 = scalar_select %p180, %s19, 0
      %s182 = smul.addr %s179, 4
      %s183 = sadd.s32 %s181, %s182
      %s184 = smul.addr %s183, 8
      %s185 = scalar_lea.vmem %s3, %s184
      %p186 = scmp.lt.s32.totalorder %s18, 1
      %s187 = scalar_select %p186, %s18, 1
      %p188 = scmp.lt.s32.totalorder %s19, 0
      %s189 = scalar_select %p188, %s19, 0
      %s190 = smul.addr %s187, 2
      %s191 = sadd.s32 %s189, %s190
      %s192 = smul.addr %s191, 4
      %s193 = scalar_lea.vmem %s0, %s192
      %p194 = scmp.lt.s32.totalorder %s18, 1
      %s195 = scalar_select %p194, %s18, 1
      %p196 = scmp.lt.s32.totalorder %s19, 0
      %s197 = scalar_select %p196, %s19, 0
      %s198 = smul.addr %s195, 4
      %s199 = sadd.s32 %s197, %s198
      %s200 = smul.addr %s199, 8
      %s201 = scalar_lea.vmem %s3, %s200
      %v203 = vld [vmem:[%s1] sm:$0xf]
      %v204 = vld [vmem:[%s1 + $0x4] sm:$0xf]
      %v205 = vld [vmem:[%s1 + $0x8] sm:$0xf]
      %v206 = vld [vmem:[%s1 + $0xc] sm:$0xf]
      %v207 = vld [vmem:[%s193] sm:$0xf]
      %v208 = vld [vmem:[%s193 + $0x4] sm:$0xf]
      %v209 = vld [vmem:[%s2] sm:$0xff]
      %v210 = vld [vmem:[%s2 + $0x8] sm:$0xff]
      %v211 = vld [vmem:[%s2 + $0x10] sm:$0xff]
      %v212 = vld [vmem:[%s2 + $0x18] sm:$0xff]
      %214 = vset.pattern.permute.xlu0 0
      %215 = vperm.xlu0 %214, %v209
      %v216 = vpop.permute.xlu0 %215
      %219 = vset.pattern.permute.xlu0 0
      %220 = vperm.xlu0 %219, %v210
      %v221 = vpop.permute.xlu0 %220
      %224 = vset.pattern.permute.xlu0 0
      %225 = vperm.xlu0 %224, %v211
      %v226 = vpop.permute.xlu0 %225
      %229 = vset.pattern.permute.xlu0 0
      %230 = vperm.xlu0 %229, %v212
      %v231 = vpop.permute.xlu0 %230
      %v237 = vunpack.c.l.b16 %v203
      %v238 = vunpack.c.l.b16 %v204
      %v239 = vunpack.c.l.b16 %v205
      %v240 = vunpack.c.l.b16 %v206
      %v241 = vpack.c.b16 %v238, %v237
      %v242 = vpack.c.b16 %v240, %v239
      %v245 = vunpack.c.l.b16 %v207
      %v246 = vunpack.c.l.b16 %v208
      %v247 = vpack.c.b16 %v246, %v245
      %vm249 = vcmask 130048
      %v251 = vsel %vm249, %v241, 0
      %v254 = vsel %vm249, %v242, 0
      %256 = vmatpush.bf16.msra.mxu0 0
      %257 = vmatpush.bf16.msra.mxu0 0
      %258 = vmatpush.bf16.msra.mxu0 0
      %259 = vmatpush.bf16.msra.mxu0 0
      %260 = vmatpush.bf16.msra.mxu0 0
      %261 = vmatpush.bf16.msra.mxu0 0
      %262 = vmatpush.bf16.msra.mxu0 0
      %263 = vmatpush.bf16.msra.mxu0 %v247
      %264 = vmatmul.bf16.gmra.mxu0 %v251
      %v265 = vpop.f32.mrf.mxu0
      %v266 = vadd.f32 %v216, %v265
      %v267 = vpop.f32.mrf.mxu0
      %v268 = vadd.f32 %v221, %v267
      %269 = vmatmul.bf16.gmra.mxu0 %v254
      %v270 = vpop.f32.mrf.mxu0
      %v271 = vadd.f32 %v226, %v270
      %v272 = vpop.f32.mrf.mxu0
      %v273 = vadd.f32 %v231, %v272
      %274 = vdwg.mxu0
      %v275 = vsub.f32 0.0, %v266
      %v276 = vsub.f32 0.0, %v268
      %v277 = vsub.f32 0.0, %v271
      %v278 = vsub.f32 0.0, %v273
      %v279 = vmul.f32 %v275, 1.442695
      %v280 = vpow.pop %v279
      %v281 = vmul.f32 %v276, 1.442695
      %v282 = vpow.pop %v281
      %v283 = vmul.f32 %v277, 1.442695
      %v284 = vpow.pop %v283
      %v285 = vmul.f32 %v278, 1.442695
      %v286 = vpow.pop %v285
      %v287 = vadd.f32 %v280, 1.0
      %v288 = vadd.f32 %v282, 1.0
      %v289 = vadd.f32 %v284, 1.0
      %v290 = vadd.f32 %v286, 1.0
      %v291 = vrcp.pop %v287
      %v292 = vrcp.pop %v288
      %v293 = vrcp.pop %v289
      %v294 = vrcp.pop %v290
      %v295 = vmul.f32 %v266, %v291
      %v296 = vmul.f32 %v268, %v292
      %v297 = vmul.f32 %v271, %v293
      %v298 = vmul.f32 %v273, %v294
      %vm299 = vcmask 523264
      %300 = vst.msk [vmem:[%s201] sm:$0xff] %vm299, %v295
      %301 = vst.msk [vmem:[%s201 + $0x8] sm:$0xff] %vm299, %v296
      %302 = vst.msk [vmem:[%s201 + $0x10] sm:$0xff] %vm299, %v297
      %303 = vst.msk [vmem:[%s201 + $0x18] sm:$0xff] %vm299, %v298
      %p304 = scmp.lt.s32.totalorder %s18, 1
      %s305 = scalar_select %p304, %s18, 1
      %p306 = scmp.lt.s32.totalorder %s19, 0
      %s307 = scalar_select %p306, %s19, 0
      %s308 = smul.addr %s305, 4
      %s309 = sadd.s32 %s307, %s308
      %s310 = smul.addr %s309, 8
      %s311 = scalar_lea.vmem %s3, %s310
      // Predicated region
      $region33: #{focus_forward.1} parent=31 // pred_check
        %p312 = pneg %p116
      $region34: #{focus_forward.1} parent=31 // pred_check_branch
        %314 = sbr.rel (%p312) target = $region36
      $region35: #{focus_forward.1} parent=31 // pred_region
        _
      $region36: #{focus_forward.1} parent=31 // pred_fallthru
        _
    $region32: #{focus_forward.1} parent=5 // pred_fallthru
      _
    %p315 = scmp.le.s32.totalorder 2, %s9
    // Predicated region
    $region37: #{focus_forward.1} parent=5 // pred_check
      %p316 = pneg %p315
    $region38: #{focus_forward.1} parent=5 // pred_check_branch
      %318 = sbr.rel (%p316) target = $region40
    $region39: #{focus_forward.1} parent=5 // pred_region
      %s319 = ssub.s32 %s9, 2
      // Predicated region
      $region41: #{focus_forward.1} parent=39 // pred_check
        %p320 = pneg %p122
      $region42: #{focus_forward.1} parent=39 // pred_check_branch
        %322 = sbr.rel (%p320) target = $region44
      $region43: #{focus_forward.1} parent=39 // pred_region
        %p323 = scmp.lt.s32.totalorder %s20, 1
        %s324 = scalar_select %p323, %s20, 1
        %p325 = scmp.lt.s32.totalorder %s21, 0
        %s326 = scalar_select %p325, %s21, 0
        %s327 = smul.addr %s324, 4
        %s328 = sadd.s32 %s326, %s327
        %s329 = smul.addr %s328, 8
        %s330 = scalar_lea.vmem %s3, %s329
      $region44: #{focus_forward.1} parent=39 // pred_fallthru
        _
    $region40: #{focus_forward.1} parent=5 // pred_fallthru
      _
  $region6: #{focus_forward.1} parent=0 // loop_footer
    %s13 = sadd.s32 1, %s9
  $region7: #{focus_forward.1} parent=0 // loop_footer_branch
    %8 = sbr.rel target = $region3
  $region8: #{focus_forward.1} parent=0 // loop_exit
    _

</llo_original>
